<compile_context>
chip_gen: v7x
topology: tpu7x:2x2x1
jax: 0.10.0
libtpu: 0.0.40
codegen_flags: <defaults>
</compile_context>

<pallas_src>
import functools

import jax
import jax.numpy as jnp
from jax import lax
from jax.experimental import pallas as pl
from jax.experimental.pallas import tpu as pltpu

_LANE = 128
_SUBLANE = 8
_DEFAULT_TILE = 256  # matches the v6e/v7x MXU edge


def _round_up(x, m):
    return (x + m - 1) // m * m


def _vmem_capacity_bytes():
    try:
        return int(pltpu.get_tpu_info().vmem_capacity_bytes)
    except Exception:
        return 64 * 1024 * 1024  # conservative (v7x)


def _per_operand_cap_bytes():
    # 2 embedding operands x 2 pipeline buffers should stay within ~half of
    # VMEM: ~16 MiB/operand on 128 MiB parts (v5e/v6e), ~8 MiB on v7x.
    return max(2 * 1024 * 1024, _vmem_capacity_bytes() // 8)


def _vmem_limit_bytes():
    # ~25% headroom below physical VMEM.
    try:
        return int(pltpu.get_tpu_info().vmem_capacity_bytes) * 3 // 4
    except Exception:
        return None


def _choose_tiles(batch, dim, itemsize, *, block=None, feature_block=None):
    """Return (B_pad, T, TK, D_full, num_k) respecting TPU layout rules."""
    d_pad = _round_up(dim, _LANE)          # lane-dense feature axis
    b8 = _round_up(batch, _SUBLANE)

    if block is not None:
        t = int(block)
        if t >= b8:
            t, b_pad = b8, b8
        else:
            if t % _LANE != 0:
                raise ValueError("block must be a multiple of 128 when tiling")
            b_pad = _round_up(batch, t)
    else:
        if b8 <= _DEFAULT_TILE:
            t, b_pad = b8, b8              # single tile covers the pair matrix
        else:
            t = _DEFAULT_TILE
            b_pad = _round_up(batch, t)

    if feature_block is not None:
        tk = min(d_pad, _round_up(int(feature_block), _LANE))
    else:
        cap = _per_operand_cap_bytes()
        max_k = max(_LANE, (cap // (t * itemsize)) // _LANE * _LANE)
        tk = min(d_pad, max_k)

    d_full = _round_up(d_pad, tk)
    num_k = d_full // tk
    return b_pad, t, tk, d_full, num_k


def _contrastive_kernel(i_idx_ref, j_idx_ref,
                        emb_i_ref, emb_j_ref,
                        lab_i_ref, lab_j_ref,
                        sq_i_ref, sq_j_ref,
                        out_ref, *scratch,
                        margin, batch, tm, tn, num_k, needs_mask):
    t = pl.program_id(0)
    k = pl.program_id(1)
    i_blk = i_idx_ref[t]
    j_blk = j_idx_ref[t]

    # MXU Gram contribution for this feature chunk, f32 accumulation.
    contrib = lax.dot_general(
        emb_i_ref[...], emb_j_ref[...],
        dimension_numbers=(((1,), (1,)), ((), ())),
        preferred_element_type=jnp.float32,
    )  # (TM, TN) f32

    def _epilogue(gram):
        # ||xi||^2 + ||xj||^2 - 2<xi,xj>, clamped at 0.
        d2 = sq_i_ref[...] + sq_j_ref[...] - 2.0 * gram
        d2 = jnp.maximum(d2, 0.0)

        row_ids = lax.broadcasted_iota(jnp.int32, (tm, 1), 0) + i_blk * tm
        col_ids = lax.broadcasted_iota(jnp.int32, (1, tn), 1) + j_blk * tn

        # Self-distances are exactly 0 in cdist; kill Gram-trick cancellation.
        d2 = jnp.where(row_ids == col_ids, 0.0, d2)
        dist = jnp.sqrt(d2) + jnp.float32(1e-8)   # matches `cdist(...) + 1e-08`

        same = lab_i_ref[...] == lab_j_ref[...]   # broadcast (TM,1)==(1,TN)
        hinge = jnp.maximum(jnp.float32(margin) - dist, 0.0)
        term = jnp.where(same, dist * dist, hinge * hinge)

        if needs_mask:  # only when B is not tile-aligned (static decision)
            valid = (row_ids < batch) & (col_ids < batch)
            term = jnp.where(valid, term, 0.0)

        # Fold rows with pure VALU vreg adds (no cross-lane XLU reduce):
        # (TM, TN) -> (TM//8, 8, TN) -> sum over leading axis -> (8, TN).
        part = jnp.sum(term.reshape(tm // _SUBLANE, _SUBLANE, tn), axis=0)

        # Off-diagonal tiles stand in for their mirror tile as well.
        weight = jnp.where(i_blk == j_blk, jnp.float32(1.0), jnp.float32(2.0))
        out_ref[...] = (weight * part)[None, :, :]

    if num_k == 1:
        _epilogue(contrib)
    else:
        gram_ref = scratch[0]

        @pl.when(k == 0)
        def _():
            gram_ref[...] = contrib

        @pl.when(k > 0)
        def _():
            gram_ref[...] += contrib

        @pl.when(k == num_k - 1)
        def _():
            _epilogue(gram_ref[...])


def contrastive_loss(embeddings, labels, margin=0.2, *,
                     block=None, feature_block=None):
    """Pallas implementation of ContrastiveLoss.forward.

    Args:
        embeddings: (B, D) float array (f32 or bf16).
        labels: (B,) integer (or float) class labels.
        margin: margin for dissimilar pairs.
        block: optional pair-tile edge override (multiple of 128 when tiling).
        feature_block: optional feature-chunk override (rounded up to 128).

    Returns:
        Scalar float32 loss.
    """
    B, D = embeddings.shape
    itemsize = jnp.dtype(embeddings.dtype).itemsize
    B_pad, T, TK, D_full, num_k = _choose_tiles(
        B, D, itemsize, block=block, feature_block=feature_block)

    num_i = B_pad // T
    num_steps = num_i * (num_i + 1) // 2       # upper-triangular tile count

    # Integer label compare (avoids f32 == collisions for large label values).
    if jnp.issubdtype(labels.dtype, jnp.integer) or labels.dtype == jnp.bool_:
        lab = labels.astype(jnp.int32)
    else:
        lab = labels.astype(jnp.float32)

    pad_b = B_pad - B
    pad_d = D_full - D
    emb_p = embeddings
    if pad_b or pad_d:
        emb_p = jnp.pad(embeddings, ((0, pad_b), (0, pad_d)))
    lab_p = jnp.pad(lab, (0, pad_b)) if pad_b else lab

    # f32 squared norms and both orientations precomputed in the wrapper so the
    # kernel never transposes (no per-tile XLU shuffles).
    xf = embeddings.astype(jnp.float32)
    sq = jnp.sum(xf * xf, axis=-1)
    if pad_b:
        sq = jnp.pad(sq, (0, pad_b))
    sq_col = sq.reshape(B_pad, 1)
    sq_row = sq.reshape(1, B_pad)
    lab_col = lab_p.reshape(B_pad, 1)
    lab_row = lab_p.reshape(1, B_pad)

    # Scalar-prefetched upper-triangular tile list (j >= i).
    tri = [(i, j) for i in range(num_i) for j in range(i, num_i)]
    i_idx = jnp.asarray([p[0] for p in tri], dtype=jnp.int32)
    j_idx = jnp.asarray([p[1] for p in tri], dtype=jnp.int32)

    kernel = functools.partial(
        _contrastive_kernel, margin=float(margin), batch=B,
        tm=T, tn=T, num_k=num_k, needs_mask=(B_pad != B))

    cost = pl.CostEstimate(
        flops=num_steps * (2 * T * T * D_full + 10 * T * T),
        transcendentals=num_steps * T * T,                  # one sqrt per pair
        bytes_accessed=(num_steps * (2 * T * D_full * itemsize + 16 * T)
                        + num_steps * _SUBLANE * T * 4),
    )

    scratch_shapes = [pltpu.VMEM((T, T), jnp.float32)] if num_k > 1 else []

    partials = pl.pallas_call(
        kernel,
        out_shape=jax.ShapeDtypeStruct((num_steps, _SUBLANE, T), jnp.float32),
        grid_spec=pltpu.PrefetchScalarGridSpec(
            num_scalar_prefetch=2,
            grid=(num_steps, num_k),
            in_specs=[
                pl.BlockSpec((T, TK), lambda t, k, ii, jj: (ii[t], k)),   # rows
                pl.BlockSpec((T, TK), lambda t, k, ii, jj: (jj[t], k)),   # cols
                pl.BlockSpec((T, 1), lambda t, k, ii, jj: (ii[t], 0)),    # labels col-vec
                pl.BlockSpec((1, T), lambda t, k, ii, jj: (0, jj[t])),    # labels row-vec
                pl.BlockSpec((T, 1), lambda t, k, ii, jj: (ii[t], 0)),    # |x|^2 col-vec
                pl.BlockSpec((1, T), lambda t, k, ii, jj: (0, jj[t])),    # |x|^2 row-vec
            ],
            out_specs=pl.BlockSpec((1, _SUBLANE, T),
                                   lambda t, k, ii, jj: (t, 0, 0)),
            scratch_shapes=scratch_shapes,
        ),
        compiler_params=pltpu.CompilerParams(
            dimension_semantics=("parallel", "arbitrary"),
            vmem_limit_bytes=_vmem_limit_bytes(),
        ),
        cost_estimate=cost,
    )(i_idx, j_idx, emb_p, emb_p, lab_col, lab_row, sq_col, sq_row)

    return jnp.sum(partials) / jnp.float32(B)


def _reference_loss(embeddings, labels, margin=0.2):
    """Plain-JAX reference mirroring the PyTorch code (for validation)."""
    diff = embeddings[:, None, :] - embeddings[None, :, :]
    dist = jnp.sqrt(jnp.sum(diff * diff, axis=-1)) + 1e-8
    lm = (labels[None, :] == labels[:, None]).astype(jnp.float32)
    pos = lm * dist ** 2
    neg = (1.0 - lm) * jnp.maximum(margin - dist, 0.0) ** 2
    return (pos + neg).sum() / embeddings.shape[0]


if __name__ == "__main__":
    key = jax.random.PRNGKey(0)
    k1, k2, k3, k4, k5, k6 = jax.random.split(key, 6)

    # Case 1: module-sized toy shapes (single tile, single feature chunk).
    batch, embed_dim = 8, 32
    emb1 = jax.random.normal(k1, (batch, embed_dim), dtype=jnp.float32)
    lab1 = jax.random.randint(k2, (batch,), 0, 3, dtype=jnp.int32)
    loss1 = jax.block_until_ready(contrastive_loss(emb1, lab1, margin=0.2))
    ref1 = _reference_loss(emb1, lab1, margin=0.2)
    assert jnp.allclose(loss1, ref1, rtol=2e-4, atol=1e-5), (loss1, ref1)

    # Case 2: non-multiple batch with forced 128-edge tiling exercises the
    # triangular tile list, off-diagonal x2 weighting and the padding mask.
    emb2 = jax.random.normal(k3, (200, 64), dtype=jnp.float32)
    lab2 = jax.random.randint(k4, (200,), 0, 5, dtype=jnp.int32)
    loss2 = jax.block_until_ready(
        contrastive_loss(emb2, lab2, margin=0.2, block=128))
    ref2 = _reference_loss(emb2, lab2, margin=0.2)
    assert jnp.allclose(loss2, ref2, rtol=2e-4, atol=1e-3), (loss2, ref2)

    # Case 3: forced feature (K) tiling exercises the gram-scratch accumulator
    # and the pl.when epilogue path.
    emb3 = jax.random.normal(k5, (144, 200), dtype=jnp.float32)
    lab3 = jax.random.randint(k6, (144,), 0, 4, dtype=jnp.int32)
    loss3 = jax.block_until_ready(
        contrastive_loss(emb3, lab3, margin=0.2, block=128, feature_block=128))
    ref3 = _reference_loss(emb3, lab3, margin=0.2)
    assert jnp.allclose(loss3, ref3, rtol=2e-4, atol=1e-3), (loss3, ref3)

    print("KERNEL_OK")
</pallas_src>

<mosaic_0001>
module attributes {stable_mosaic.version = 11 : i64} {
  func.func @_contrastive_kernel(%arg0: i32, %arg1: i32, %arg2: memref<1xi32, #tpu.memory_space<smem>>, %arg3: memref<1xi32, #tpu.memory_space<smem>>, %arg4: memref<8x128xf32, #tpu.memory_space<vmem>>, %arg5: memref<8x128xf32, #tpu.memory_space<vmem>>, %arg6: memref<8x1xi32, #tpu.memory_space<vmem>>, %arg7: memref<1x8xi32, #tpu.memory_space<vmem>>, %arg8: memref<8x1xf32, #tpu.memory_space<vmem>>, %arg9: memref<1x8xf32, #tpu.memory_space<vmem>>, %arg10: memref<1x8x8xf32, #tpu.memory_space<vmem>>) attributes {dimension_semantics = [#tpu.dimension_semantics<parallel>, #tpu.dimension_semantics<arbitrary>], iteration_bounds = array<i64: 1, 1>, scalar_prefetch = 2 : i64, scratch_operands = 0 : i64, tpu.core_type = #tpu.core_type<tc>, window_params = [{transform_indices = @transform_0, window_bounds = array<i64: 8, 128>}, {transform_indices = @transform_1, window_bounds = array<i64: 8, 128>}, {transform_indices = @transform_2, window_bounds = array<i64: 8, 1>}, {transform_indices = @transform_3, window_bounds = array<i64: 1, 8>}, {transform_indices = @transform_4, window_bounds = array<i64: 8, 1>}, {transform_indices = @transform_5, window_bounds = array<i64: 1, 8>}, {transform_indices = @transform_6, window_bounds = array<i64: 1, 8, 8>}]} {
    %0 = arith.index_cast %arg0 : i32 to index
    %1 = memref.load %arg2[%0] : memref<1xi32, #tpu.memory_space<smem>>
    %2 = arith.index_cast %arg0 : i32 to index
    %3 = memref.load %arg3[%2] : memref<1xi32, #tpu.memory_space<smem>>
    %c0 = arith.constant 0 : index
    %c0_0 = arith.constant 0 : index
    %4 = vector.load %arg4[%c0, %c0_0] : memref<8x128xf32, #tpu.memory_space<vmem>>, vector<8x128xf32>
    %c0_1 = arith.constant 0 : index
    %c0_2 = arith.constant 0 : index
    %5 = vector.load %arg5[%c0_1, %c0_2] : memref<8x128xf32, #tpu.memory_space<vmem>>, vector<8x128xf32>
    %cst = arith.constant dense<0.000000e+00> : vector<8x8xf32>
    %6 = tpu.matmul %4, %5, %cst {dimension_numbers = #tpu.dot_dimension_numbers<[1], [1], [0], [0], [0, 0, 1, 0], [], []>} : vector<8x128xf32>, vector<8x128xf32>, vector<8x8xf32> -> vector<8x8xf32>
    %c0_3 = arith.constant 0 : index
    %c0_4 = arith.constant 0 : index
    %7 = vector.load %arg8[%c0_3, %c0_4] : memref<8x1xf32, #tpu.memory_space<vmem>>, vector<8x1xf32>
    %c0_5 = arith.constant 0 : index
    %c0_6 = arith.constant 0 : index
    %8 = vector.load %arg9[%c0_5, %c0_6] : memref<1x8xf32, #tpu.memory_space<vmem>>, vector<1x8xf32>
    %9 = vector.broadcast %7 : vector<8x1xf32> to vector<8x8xf32>
    %10 = vector.broadcast %8 : vector<1x8xf32> to vector<8x8xf32>
    %11 = arith.addf %9, %10 : vector<8x8xf32>
    %cst_7 = arith.constant 2.000000e+00 : f32
    %12 = vector.broadcast %cst_7 : f32 to vector<8x8xf32>
    %13 = arith.mulf %12, %6 : vector<8x8xf32>
    %14 = arith.subf %11, %13 : vector<8x8xf32>
    %cst_8 = arith.constant 0.000000e+00 : f32
    %15 = vector.broadcast %cst_8 : f32 to vector<8x8xf32>
    %16 = arith.maximumf %14, %15 : vector<8x8xf32>
    %17 = tpu.iota {dimensions = array<i32: 0>} : vector<8x1xi32>
    %c8_i32 = arith.constant 8 : i32
    %18 = arith.muli %1, %c8_i32 : i32
    %19 = vector.broadcast %18 : i32 to vector<8x1xi32>
    %20 = arith.addi %17, %19 : vector<8x1xi32>
    %21 = tpu.iota {dimensions = array<i32: 1>} : vector<1x8xi32>
    %c8_i32_9 = arith.constant 8 : i32
    %22 = arith.muli %3, %c8_i32_9 : i32
    %23 = vector.broadcast %22 : i32 to vector<1x8xi32>
    %24 = arith.addi %21, %23 : vector<1x8xi32>
    %25 = vector.broadcast %20 : vector<8x1xi32> to vector<8x8xi32>
    %26 = vector.broadcast %24 : vector<1x8xi32> to vector<8x8xi32>
    %27 = arith.cmpi eq, %25, %26 : vector<8x8xi32>
    %cst_10 = arith.constant 0.000000e+00 : f32
    %28 = vector.broadcast %cst_10 : f32 to vector<8x8xf32>
    %29 = arith.select %27, %28, %16 : vector<8x8xi1>, vector<8x8xf32>
    %30 = math.sqrt %29 : vector<8x8xf32>
    %cst_11 = arith.constant 9.99999993E-9 : f32
    %31 = vector.broadcast %cst_11 : f32 to vector<8x8xf32>
    %32 = arith.addf %30, %31 : vector<8x8xf32>
    %c0_12 = arith.constant 0 : index
    %c0_13 = arith.constant 0 : index
    %33 = vector.load %arg6[%c0_12, %c0_13] : memref<8x1xi32, #tpu.memory_space<vmem>>, vector<8x1xi32>
    %c0_14 = arith.constant 0 : index
    %c0_15 = arith.constant 0 : index
    %34 = vector.load %arg7[%c0_14, %c0_15] : memref<1x8xi32, #tpu.memory_space<vmem>>, vector<1x8xi32>
    %35 = vector.broadcast %33 : vector<8x1xi32> to vector<8x8xi32>
    %36 = vector.broadcast %34 : vector<1x8xi32> to vector<8x8xi32>
    %37 = arith.cmpi eq, %35, %36 : vector<8x8xi32>
    %cst_16 = arith.constant 2.000000e-01 : f32
    %38 = vector.broadcast %cst_16 : f32 to vector<8x8xf32>
    %39 = arith.subf %38, %32 : vector<8x8xf32>
    %cst_17 = arith.constant 0.000000e+00 : f32
    %40 = vector.broadcast %cst_17 : f32 to vector<8x8xf32>
    %41 = arith.maximumf %39, %40 : vector<8x8xf32>
    %42 = arith.mulf %32, %32 : vector<8x8xf32>
    %43 = arith.mulf %41, %41 : vector<8x8xf32>
    %44 = arith.select %37, %42, %43 : vector<8x8xi1>, vector<8x8xf32>
    %45 = vector.shape_cast %44 : vector<8x8xf32> to vector<1x8x8xf32>
    %cst_18 = arith.constant dense<0.000000e+00> : vector<8x8xf32>
    %46 = vector.multi_reduction <add>, %45, %cst_18 [0] : vector<1x8x8xf32> to vector<8x8xf32>
    %47 = arith.cmpi eq, %1, %3 : i32
    %cst_19 = arith.constant 1.000000e+00 : f32
    %cst_20 = arith.constant 2.000000e+00 : f32
    %48 = arith.select %47, %cst_19, %cst_20 : f32
    %49 = vector.broadcast %48 : f32 to vector<8x8xf32>
    %50 = arith.mulf %49, %46 : vector<8x8xf32>
    %51 = vector.shape_cast %50 : vector<8x8xf32> to vector<1x8x8xf32>
    %c0_21 = arith.constant 0 : index
    %c0_22 = arith.constant 0 : index
    %c0_23 = arith.constant 0 : index
    %52 = vector.load %arg10[%c0_21, %c0_22, %c0_23] : memref<1x8x8xf32, #tpu.memory_space<vmem>>, vector<1x8x8xf32>
    tpu.vector_store %arg10[%c0_21, %c0_22, %c0_23], %51 {strides = array<i32>} : memref<1x8x8xf32, #tpu.memory_space<vmem>>, vector<1x8x8xf32>,
    return
  }
  func.func @transform_0(%arg0: i32, %arg1: i32, %arg2: memref<1xi32, #tpu.memory_space<smem>>, %arg3: memref<1xi32, #tpu.memory_space<smem>>) -> (i32, i32) {
    %0 = arith.index_cast %arg0 : i32 to index
    %1 = memref.load %arg2[%0] : memref<1xi32, #tpu.memory_space<smem>>
    %c0_i32 = arith.constant 0 : i32
    return %1, %arg1 : i32, i32
  }
  func.func @transform_1(%arg0: i32, %arg1: i32, %arg2: memref<1xi32, #tpu.memory_space<smem>>, %arg3: memref<1xi32, #tpu.memory_space<smem>>) -> (i32, i32) {
    %0 = arith.index_cast %arg0 : i32 to index
    %1 = memref.load %arg3[%0] : memref<1xi32, #tpu.memory_space<smem>>
    %c0_i32 = arith.constant 0 : i32
    return %1, %arg1 : i32, i32
  }
  func.func @transform_2(%arg0: i32, %arg1: i32, %arg2: memref<1xi32, #tpu.memory_space<smem>>, %arg3: memref<1xi32, #tpu.memory_space<smem>>) -> (i32, i32) {
    %0 = arith.index_cast %arg0 : i32 to index
    %1 = memref.load %arg2[%0] : memref<1xi32, #tpu.memory_space<smem>>
    %c0_i32 = arith.constant 0 : i32
    %c0_i32_0 = arith.constant 0 : i32
    return %1, %c0_i32 : i32, i32
  }
  func.func @transform_3(%arg0: i32, %arg1: i32, %arg2: memref<1xi32, #tpu.memory_space<smem>>, %arg3: memref<1xi32, #tpu.memory_space<smem>>) -> (i32, i32) {
    %0 = arith.index_cast %arg0 : i32 to index
    %1 = memref.load %arg3[%0] : memref<1xi32, #tpu.memory_space<smem>>
    %c0_i32 = arith.constant 0 : i32
    %c0_i32_0 = arith.constant 0 : i32
    return %c0_i32, %1 : i32, i32
  }
  func.func @transform_4(%arg0: i32, %arg1: i32, %arg2: memref<1xi32, #tpu.memory_space<smem>>, %arg3: memref<1xi32, #tpu.memory_space<smem>>) -> (i32, i32) {
    %0 = arith.index_cast %arg0 : i32 to index
    %1 = memref.load %arg2[%0] : memref<1xi32, #tpu.memory_space<smem>>
    %c0_i32 = arith.constant 0 : i32
    %c0_i32_0 = arith.constant 0 : i32
    return %1, %c0_i32 : i32, i32
  }
  func.func @transform_5(%arg0: i32, %arg1: i32, %arg2: memref<1xi32, #tpu.memory_space<smem>>, %arg3: memref<1xi32, #tpu.memory_space<smem>>) -> (i32, i32) {
    %0 = arith.index_cast %arg0 : i32 to index
    %1 = memref.load %arg3[%0] : memref<1xi32, #tpu.memory_space<smem>>
    %c0_i32 = arith.constant 0 : i32
    %c0_i32_0 = arith.constant 0 : i32
    return %c0_i32, %1 : i32, i32
  }
  func.func @transform_6(%arg0: i32, %arg1: i32, %arg2: memref<1xi32, #tpu.memory_space<smem>>, %arg3: memref<1xi32, #tpu.memory_space<smem>>) -> (i32, i32, i32) {
    %c0_i32 = arith.constant 0 : i32
    %c0_i32_0 = arith.constant 0 : i32
    %c0_i32_1 = arith.constant 0 : i32
    return %arg0, %c0_i32, %c0_i32_0 : i32, i32, i32
  }
}

</mosaic_0001>

<llo_original>
// kernel: tpu_custom_call.1
$region0: #{tpu_custom_call.1}
  #allocation0 [shape = 'u32[]', space=smem, size = 0x4, offset = 0x4, fixed_abs, tag = 'smem constant byte address 0x4 - core index']
  #allocation1 [shape = 'u32[144,128]{1,0:T(1,128)}', space=vmem, size = 0x12000, scoped, tag = 'internal scratch']
  #allocation2 [shape = 's32[1]{0}', space=sflag, size = 0x4, scoped, tag = 'scoped memory for tpu_custom_call.1']
  #allocation3 [shape = 's32[1]{0:T(128)S(6)}', space=smem, size = 0x200, scoped, tag = 'prefetched SMEM operand 0']
  #allocation4 [shape = 's32[1]{0:T(128)S(6)}', space=smem, size = 0x200, scoped, tag = 'prefetched SMEM operand 1']
  %s0 = inlined_call_operand.<no memory space> [shape: s32[1], index: 0, kind: input, shape index: {}]
  %s1 = inlined_call_operand.<no memory space> [shape: s32[1], index: 1, kind: input, shape index: {}]
  %s2 = inlined_call_operand.vmem [shape: f32[8,128], index: 2, kind: input, shape index: {}]
  %s3 = inlined_call_operand.vmem [shape: f32[8,128], index: 3, kind: input, shape index: {}]
  %s4 = inlined_call_operand.vmem [shape: s32[8,1], index: 4, kind: input, shape index: {}]
  %s5 = inlined_call_operand.vmem [shape: s32[1,8], index: 5, kind: input, shape index: {}]
  %s6 = inlined_call_operand.vmem [shape: f32[8,1], index: 6, kind: input, shape index: {}]
  %s7 = inlined_call_operand.vmem [shape: f32[1,8], index: 7, kind: input, shape index: {}]
  %s8 = inlined_call_operand.hbm [shape: f32[1,8,8], index: 8, kind: output, shape index: {}]
  %s9 = sld [smem:[#allocation0]]
  $region34: #{tpu_custom_call.1} parent=0
    _
  %s11 = ssub.s32 1, %s9
  %s12 = scalar_select 0, %s11, %s9
  %13 = sst [smem:[#allocation3]] %s0
  %14 = sst [smem:[#allocation4]] %s1
  $region1: #{tpu_custom_call.1} parent=0
    #allocation5 [shape = 'u8[4096]{0}', space=vmem, size = 0x1000, scoped, tag = 'output window, operand 0, single buffered']
    #allocation6 [shape = 's32[1]{0}', space=sflag, size = 0x4, scoped, tag = 'scoped memory for tpu_custom_call.1']
    %15 = vsyncpa [#allocation6], 0
    // Predicated region
    $region2: #{tpu_custom_call.1} parent=1 // pred_check
      _
    $region3: #{tpu_custom_call.1} parent=1 // pred_check_branch
      %17 = sbr.rel (0) target = $region5
    $region4: #{tpu_custom_call.1} parent=1 // pred_region
      %s18 = sld [smem:[#allocation3]]
      %p19 = scmp.lt.s32.totalorder %s18, 0
      %s20 = scalar_select %p19, %s18, 0
      %s21 = smul.addr %s20, 8
      %s22 = scalar_lea.vmem %s2, %s21
      %s23 = sld [smem:[#allocation3]]
    $region5: #{tpu_custom_call.1} parent=1 // pred_fallthru
      _
    // Predicated region
    $region6: #{tpu_custom_call.1} parent=1 // pred_check
      _
    $region7: #{tpu_custom_call.1} parent=1 // pred_check_branch
      %25 = sbr.rel (0) target = $region9
    $region8: #{tpu_custom_call.1} parent=1 // pred_region
      %s26 = sld [smem:[#allocation4]]
      %p27 = scmp.lt.s32.totalorder %s26, 0
      %s28 = scalar_select %p27, %s26, 0
      %s29 = smul.addr %s28, 8
      %s30 = scalar_lea.vmem %s3, %s29
      %s31 = sld [smem:[#allocation4]]
    $region9: #{tpu_custom_call.1} parent=1 // pred_fallthru
      _
    // Predicated region
    $region10: #{tpu_custom_call.1} parent=1 // pred_check
      _
    $region11: #{tpu_custom_call.1} parent=1 // pred_check_branch
      %33 = sbr.rel (0) target = $region13
    $region12: #{tpu_custom_call.1} parent=1 // pred_region
      %s34 = sld [smem:[#allocation3]]
      %p35 = scmp.lt.s32.totalorder %s34, 0
      %s36 = scalar_select %p35, %s34, 0
      %s37 = smul.addr %s36, 8
      %s38 = scalar_lea.vmem %s4, %s37
      %s39 = sld [smem:[#allocation3]]
    $region13: #{tpu_custom_call.1} parent=1 // pred_fallthru
      _
    // Predicated region
    $region14: #{tpu_custom_call.1} parent=1 // pred_check
      _
    $region15: #{tpu_custom_call.1} parent=1 // pred_check_branch
      %41 = sbr.rel (0) target = $region17
    $region16: #{tpu_custom_call.1} parent=1 // pred_region
      %s42 = sld [smem:[#allocation4]]
      %p43 = scmp.lt.s32.totalorder %s42, 0
      %s44 = scalar_select %p43, %s42, 0
      %s45 = scalar_lea.vmem %s5, %s44
      %s46 = sld [smem:[#allocation4]]
    $region17: #{tpu_custom_call.1} parent=1 // pred_fallthru
      _
    // Predicated region
    $region18: #{tpu_custom_call.1} parent=1 // pred_check
      _
    $region19: #{tpu_custom_call.1} parent=1 // pred_check_branch
      %48 = sbr.rel (0) target = $region21
    $region20: #{tpu_custom_call.1} parent=1 // pred_region
      %s49 = sld [smem:[#allocation3]]
      %p50 = scmp.lt.s32.totalorder %s49, 0
      %s51 = scalar_select %p50, %s49, 0
      %s52 = smul.addr %s51, 8
      %s53 = scalar_lea.vmem %s6, %s52
      %s54 = sld [smem:[#allocation3]]
    $region21: #{tpu_custom_call.1} parent=1 // pred_fallthru
      _
    // Predicated region
    $region22: #{tpu_custom_call.1} parent=1 // pred_check
      _
    $region23: #{tpu_custom_call.1} parent=1 // pred_check_branch
      %56 = sbr.rel (0) target = $region25
    $region24: #{tpu_custom_call.1} parent=1 // pred_region
      %s57 = sld [smem:[#allocation4]]
      %p58 = scmp.lt.s32.totalorder %s57, 0
      %s59 = scalar_select %p58, %s57, 0
      %s60 = scalar_lea.vmem %s7, %s59
      %s61 = sld [smem:[#allocation4]]
    $region25: #{tpu_custom_call.1} parent=1 // pred_fallthru
      _
    %s62 = sld [smem:[#allocation3]]
    %p63 = scmp.lt.s32.totalorder %s62, 0
    %s64 = scalar_select %p63, %s62, 0
    %s65 = smul.addr %s64, 8
    %s66 = scalar_lea.vmem %s2, %s65
    %s67 = sld [smem:[#allocation4]]
    %p68 = scmp.lt.s32.totalorder %s67, 0
    %s69 = scalar_select %p68, %s67, 0
    %s70 = smul.addr %s69, 8
    %s71 = scalar_lea.vmem %s3, %s70
    %s72 = sld [smem:[#allocation3]]
    %p73 = scmp.lt.s32.totalorder %s72, 0
    %s74 = scalar_select %p73, %s72, 0
    %s75 = smul.addr %s74, 8
    %s76 = scalar_lea.vmem %s4, %s75
    %s77 = sld [smem:[#allocation4]]
    %p78 = scmp.lt.s32.totalorder %s77, 0
    %s79 = scalar_select %p78, %s77, 0
    %s80 = scalar_lea.vmem %s5, %s79
    %s81 = sld [smem:[#allocation3]]
    %p82 = scmp.lt.s32.totalorder %s81, 0
    %s83 = scalar_select %p82, %s81, 0
    %s84 = smul.addr %s83, 8
    %s85 = scalar_lea.vmem %s6, %s84
    %s86 = sld [smem:[#allocation4]]
    %p87 = scmp.lt.s32.totalorder %s86, 0
    %s88 = scalar_select %p87, %s86, 0
    %s89 = scalar_lea.vmem %s7, %s88
    %s90 = sld [smem:[#allocation3]]
    %p91 = scmp.lt.s32.totalorder %s90, 0
    %s92 = scalar_select %p91, %s90, 0
    %s93 = smul.addr %s92, 8
    %s94 = scalar_lea.vmem %s2, %s93
    %s95 = sld [smem:[#allocation3]]
    %s96 = sld [smem:[#allocation4]]
    %p97 = scmp.lt.s32.totalorder %s96, 0
    %s98 = scalar_select %p97, %s96, 0
    %s99 = smul.addr %s98, 8
    %s100 = scalar_lea.vmem %s3, %s99
    %s101 = sld [smem:[#allocation4]]
    %s102 = sld [smem:[#allocation3]]
    %p103 = scmp.lt.s32.totalorder %s102, 0
    %s104 = scalar_select %p103, %s102, 0
    %s105 = smul.addr %s104, 8
    %s106 = scalar_lea.vmem %s4, %s105
    %s107 = sld [smem:[#allocation3]]
    %s108 = sld [smem:[#allocation4]]
    %p109 = scmp.lt.s32.totalorder %s108, 0
    %s110 = scalar_select %p109, %s108, 0
    %s111 = scalar_lea.vmem %s5, %s110
    %s112 = sld [smem:[#allocation4]]
    %s113 = sld [smem:[#allocation3]]
    %p114 = scmp.lt.s32.totalorder %s113, 0
    %s115 = scalar_select %p114, %s113, 0
    %s116 = smul.addr %s115, 8
    %s117 = scalar_lea.vmem %s6, %s116
    %s118 = sld [smem:[#allocation3]]
    %s119 = sld [smem:[#allocation4]]
    %p120 = scmp.lt.s32.totalorder %s119, 0
    %s121 = scalar_select %p120, %s119, 0
    %s122 = scalar_lea.vmem %s7, %s121
    %s123 = sld [smem:[#allocation4]]
    %s124 = sld [smem:[#allocation3]]
    %s125 = sld [smem:[#allocation4]]
    %v126 = vld [vmem:[%s94] sm:$0xff]
    %v127 = vld [vmem:[%s100] sm:$0xff]
    %128 = vmatprep.subr.mxu0 0.0
    %129 = vmatpush1.xpose.msra.mxu0 %v127
    %130 = vmatprep.subr.mxu0 0.0
    %131 = vmatpush1.xpose.msra.mxu0 0.0
    %132 = vmatprep.subr.mxu0 0.0
    %133 = vmatpush1.xpose.msra.mxu0 0.0
    %134 = vmatprep.subr.mxu0 0.0
    %135 = vmatpush1.xpose.msra.mxu0 0.0
    %136 = vmatprep.subr.mxu0 0.0
    %137 = vmatpush1.xpose.msra.mxu0 0.0
    %138 = vmatprep.subr.mxu0 0.0
    %139 = vmatpush1.xpose.msra.mxu0 0.0
    %140 = vmatprep.subr.mxu0 0.0
    %141 = vmatpush1.xpose.msra.mxu0 0.0
    %142 = vmatprep.subr.mxu0 0.0
    %143 = vmatpush1.xpose.msra.mxu0 0.0
    %144 = vmatprep.subr.mxu0 0.0
    %145 = vmatpush1.xpose.msra.mxu0 0.0
    %146 = vmatprep.subr.mxu0 0.0
    %147 = vmatpush1.xpose.msra.mxu0 0.0
    %148 = vmatprep.subr.mxu0 0.0
    %149 = vmatpush1.xpose.msra.mxu0 0.0
    %150 = vmatprep.subr.mxu0 0.0
    %151 = vmatpush1.xpose.msra.mxu0 0.0
    %152 = vmatprep.subr.mxu0 0.0
    %153 = vmatpush1.xpose.msra.mxu0 0.0
    %154 = vmatprep.subr.mxu0 0.0
    %155 = vmatpush1.xpose.msra.mxu0 0.0
    %156 = vmatprep.subr.mxu0 0.0
    %157 = vmatpush1.xpose.msra.mxu0 0.0
    %158 = vmatprep.subr.mxu0 0.0
    %159 = vmatpush1.xpose.msra.mxu0 0.0
    %160 = vmatprep.subr.mxu0 0.0
    %161 = vmatpush1.xpose.msra.mxu0 0.0
    %162 = vmatprep.subr.mxu0 0.0
    %163 = vmatpush1.xpose.msra.mxu0 0.0
    %164 = vmatprep.subr.mxu0 0.0
    %165 = vmatpush1.xpose.msra.mxu0 0.0
    %166 = vmatprep.subr.mxu0 0.0
    %167 = vmatpush1.xpose.msra.mxu0 0.0
    %168 = vmatprep.subr.mxu0 0.0
    %169 = vmatpush1.xpose.msra.mxu0 0.0
    %170 = vmatprep.subr.mxu0 0.0
    %171 = vmatpush1.xpose.msra.mxu0 0.0
    %172 = vmatprep.subr.mxu0 0.0
    %173 = vmatpush1.xpose.msra.mxu0 0.0
    %174 = vmatprep.subr.mxu0 0.0
    %175 = vmatpush1.xpose.msra.mxu0 0.0
    %176 = vmatprep.subr.mxu0 0.0
    %177 = vmatpush1.xpose.msra.mxu0 0.0
    %178 = vmatprep.subr.mxu0 0.0
    %179 = vmatpush1.xpose.msra.mxu0 0.0
    %180 = vmatprep.subr.mxu0 0.0
    %181 = vmatpush1.xpose.msra.mxu0 0.0
    %182 = vmatprep.subr.mxu0 0.0
    %183 = vmatpush1.xpose.msra.mxu0 0.0
    %184 = vmatprep.subr.mxu0 0.0
    %185 = vmatpush1.xpose.msra.mxu0 0.0
    %186 = vmatprep.subr.mxu0 0.0
    %187 = vmatpush1.xpose.msra.mxu0 0.0
    %188 = vmatprep.subr.mxu0 0.0
    %189 = vmatpush1.xpose.msra.mxu0 0.0
    %190 = vmatprep.subr.mxu0 0.0
    %191 = vmatpush1.xpose.msra.mxu0 0.0
    %192 = vmatprep.mubr.f32.mxu0 0.0
    %193 = vmatmul.mubr.f32.gmra.mrb[0].mxu0 %v126
    %v194 = vpop.f32.mrb[0].mxu0
    %v195 = vadd.f32 0.0, %v194
    %v196 = vpop.f32.mrb[0].mxu0
    %197 = vdwg.mxu0
    %v198 = vld [vmem:[%s117] sm:$0xff]
    %v199 = vld [vmem:[%s122] sm:$0x1]
    %201 = vset.pattern.permute.xlu0 0
    %202 = vperm.xlu0 %201, %v198
    %v203 = vpop.permute.xlu0 %202
    %v206 = vlaneseq
    %v207 = vshrl.u32 %v206, 7
    %v208 = vsub.s32 0, %v207
    %v209 = vrot.slane %v199, %v208
    %v211 = vadd.f32 %v203, %v209
    %v212 = vmul.f32 %v195, 2.0
    %v213 = vsub.f32 %v211, %v212
    %v214 = vmax.f32 %v213, 0.0
    %v215 = vlaneseq
    %v216 = vshrl.u32 %v215, 7
    %s217 = smul.u32 %s124, 8
    %v218 = vstv %s217
    %v219 = vadd.s32 %v216, %v218
    %v220 = vlaneseq
    %v221 = vand.u32 %v220, 127
    %s222 = smul.u32 %s125, 8
    %v223 = vstv %s222
    %v224 = vadd.s32 %v221, %v223
    %vm225 = vcmp.eq.s32.totalorder %v219, %v224
    %v226 = vsel %vm225, 0.0, %v214
    %v227 = vrsqrt.pop %v226
    %v228 = vmul.f32 %v226, %v227
    %vm229 = vcmp.eq.f32.partialorder %v226, inf
    %v230 = vsel %vm229, %v226, %v228
    %vm231 = vcmp.eq.f32.partialorder %v226, 0.0
    %v232 = vand.u32 %v226, 2147483648
    %v233 = vsel %vm231, %v232, %v230
    %v234 = vadd.f32 %v233, 1e-08
    %v235 = vld [vmem:[%s106] sm:$0xff]
    %v236 = vld [vmem:[%s111] sm:$0x1]
    %237 = vset.pattern.permute.xlu0 0
    %238 = vperm.xlu0 %237, %v235
    %v239 = vpop.permute.xlu0 %238
    %v240 = vlaneseq
    %v241 = vshrl.u32 %v240, 7
    %v242 = vsub.s32 0, %v241
    %v243 = vrot.slane %v236, %v242
    %vm244 = vcmp.eq.s32.totalorder %v239, %v243
    %v245 = vsub.f32 0.2, %v234
    %v246 = vmax.f32 %v245, 0.0
    %v247 = vmul.f32 %v234, %v234
    %v248 = vmul.f32 %v246, %v246
    %v249 = vsel %vm244, %v247, %v248
    %v250 = vadd.f32 %v249, 0.0
    %p251 = scmp.eq.s32.totalorder %s124, %s125
    %s252 = scalar_select %p251, 1.0, 2.0
    %v253 = vstv %s252
    %v254 = vmul.f32 %v253, %v250
    %vm255 = vcmask 64512
    %256 = vst.msk [vmem:[#allocation5] sm:$0xff] %vm255, %v254
    // Predicated region
    $region26: #{tpu_custom_call.1} parent=1 // pred_check
      _
    $region27: #{tpu_custom_call.1} parent=1 // pred_check_branch
      %258 = sbr.rel (0) target = $region29
    $region28: #{tpu_custom_call.1} parent=1 // pred_region
      %s260 = ssub.s32 128, 128
      %261 = vsyncadd [#allocation6], %s260
      %s263 = sshll.u32 [#allocation5], 4
      %s264 = int_to_ptr.vmem [resolvable:$true] %s263
      %266 = dma.vmem_to_hbm [thread:$0]  %s264, 128, %s8, [#allocation6]
    $region29: #{tpu_custom_call.1} parent=1 // pred_fallthru
      _
    // Predicated region
    $region30: #{tpu_custom_call.1} parent=1 // pred_check
      _
    $region31: #{tpu_custom_call.1} parent=1 // pred_check_branch
      %268 = sbr.rel (0) target = $region33
    $region32: #{tpu_custom_call.1} parent=1 // pred_region
      %269 = dma.done [#allocation6], 128
    $region33: #{tpu_custom_call.1} parent=1 // pred_fallthru
      _
    %270 = vsyncpa [#allocation6], 1

</llo_original>
